<compile_context>
chip_gen: v6e
topology: v6e:2x2x1
jax: 0.10.0
libtpu: 0.0.40
codegen_flags: <defaults>
</compile_context>

<pallas_src>
import jax
import jax.numpy as jnp
from jax.experimental import pallas as pl
from jax.experimental.pallas import tpu as pltpu


# --------------------------------------------------------------------------
# Kernels
# --------------------------------------------------------------------------
def _full4net_kernel_hid_sublane(x_ref, w1_ref, b1_ref, w2_ref, b2_ref,
                                 w3_ref, b3_ref, w4_ref, b4_ref, out_ref):
    """Small-hid layout: activations (H, TB); batch on lanes, hid on sublanes."""
    xT = x_ref[...]                                           # (2, TB) f32
    dt = w2_ref.dtype                                         # dot operand dtype

    # Layer 1 (K=2): VPU broadcast FMAs; (H,1)*(1,TB) outer-product broadcasts.
    h1 = jnp.tanh(w1_ref[:, 0:1] * xT[0:1, :]
                  + w1_ref[:, 1:2] * xT[1:2, :]
                  + b1_ref[...])                              # (H, TB) f32

    # Layers 2/3: (H,H) @ (H,TB) MXU matmuls, f32 accumulation, f32 epilogue.
    h2 = jnp.tanh(jnp.dot(w2_ref[...], h1.astype(dt),
                          preferred_element_type=jnp.float32) + b2_ref[...])
    h3 = jnp.tanh(jnp.dot(w3_ref[...], h2.astype(dt),
                          preferred_element_type=jnp.float32) + b3_ref[...])

    # Output layer: (1,H) @ (H,TB) -> (1,TB), lane-dense store.
    z = jnp.dot(w4_ref[...], h3.astype(dt),
                preferred_element_type=jnp.float32) + b4_ref[0, 0]
    out_ref[...] = jax.nn.sigmoid(z)


def _full4net_kernel_hid_lane(x_ref, w1_ref, b1_ref, w2_ref, b2_ref,
                              w3_ref, b3_ref, w4_ref, b4_ref, out_ref):
    """Large-hid layout: activations (TB, H); hid on lanes, batch on sublanes."""
    x = x_ref[...]                                            # (TB, 2) f32
    dt = w2_ref.dtype

    # Layer 1 (K=2): VPU broadcast FMAs.
    h1 = jnp.tanh(x[:, 0:1] * w1_ref[0:1, :]
                  + x[:, 1:2] * w1_ref[1:2, :]
                  + b1_ref[...])                              # (TB, H) f32

    h2 = jnp.tanh(jnp.dot(h1.astype(dt), w2_ref[...],
                          preferred_element_type=jnp.float32) + b2_ref[...])
    h3 = jnp.tanh(jnp.dot(h2.astype(dt), w3_ref[...],
                          preferred_element_type=jnp.float32) + b3_ref[...])

    # Output: contract last dims of (1,H) and (TB,H) -> (1,TB), lane-dense.
    # TODO(synk): inspect the bundle dump for an XLU transpose of h3 here; if
    # present, benchmark against the plain h3 @ w4 (TB,1) masked-store path.
    z = jax.lax.dot_general(
        w4_ref[...], h3.astype(dt),
        dimension_numbers=(((1,), (1,)), ((), ())),
        preferred_element_type=jnp.float32) + b4_ref[0, 0]
    out_ref[...] = jax.nn.sigmoid(z)


# --------------------------------------------------------------------------
# Params
# --------------------------------------------------------------------------
def init_params(key, hid):
    """Deterministic synthetic params, stored (in, out) / (1, out) like x @ W."""
    ks = jax.random.split(key, 8)

    def lin(kw, kb, fan_in, fan_out):
        bound = 1.0 / jnp.sqrt(fan_in)
        w = jax.random.uniform(kw, (fan_in, fan_out), jnp.float32, -bound, bound)
        b = jax.random.uniform(kb, (1, fan_out), jnp.float32, -bound, bound)
        return w, b

    w1, b1 = lin(ks[0], ks[1], 2, hid)
    w2, b2 = lin(ks[2], ks[3], hid, hid)
    w3, b3 = lin(ks[4], ks[5], hid, hid)
    w4, b4 = lin(ks[6], ks[7], hid, 1)
    return {"w1": w1, "b1": b1, "w2": w2, "b2": b2,
            "w3": w3, "b3": b3, "w4": w4, "b4": b4}


def prepare_params(p, *, dot_dtype=jnp.float32):
    """Pad/layout params for the kernel.  Zero padding is exact: tanh(0)=0
    propagates and padded w4 columns are zero.  Only the matmul weights
    (w2/w3/w4) are stored in `dot_dtype` (bf16 is v5e-safe because tanh /
    bias / sigmoid stay f32 in the kernel)."""
    hid = p["w1"].shape[1]
    if hid < 128:
        # hid on sublanes (pad to multiple of 8), batch on lanes; weights (out, in).
        hp = max(8, pl.cdiv(hid, 8) * 8)
        dh = hp - hid
        return {
            "layout": "hid_sublane",
            "w1": jnp.pad(p["w1"].T, ((0, dh), (0, 0))),                      # (H, 2) f32
            "b1": jnp.pad(p["b1"].T, ((0, dh), (0, 0))),                      # (H, 1) f32
            "w2": jnp.pad(p["w2"].T, ((0, dh), (0, dh))).astype(dot_dtype),   # (H, H)
            "b2": jnp.pad(p["b2"].T, ((0, dh), (0, 0))),                      # (H, 1) f32
            "w3": jnp.pad(p["w3"].T, ((0, dh), (0, dh))).astype(dot_dtype),   # (H, H)
            "b3": jnp.pad(p["b3"].T, ((0, dh), (0, 0))),                      # (H, 1) f32
            "w4": jnp.pad(p["w4"].T, ((0, 0), (0, dh))).astype(dot_dtype),    # (1, H)
            "b4": p["b4"],                                                    # (1, 1) SMEM
        }
    # hid on lanes (pad to multiple of 128), batch on sublanes; weights (in, out).
    hp = pl.cdiv(hid, 128) * 128
    dh = hp - hid
    return {
        "layout": "hid_lane",
        "w1": jnp.pad(p["w1"], ((0, 0), (0, dh))),                            # (2, H) f32
        "b1": jnp.pad(p["b1"], ((0, 0), (0, dh))),                            # (1, H) f32
        "w2": jnp.pad(p["w2"], ((0, dh), (0, dh))).astype(dot_dtype),         # (H, H)
        "b2": jnp.pad(p["b2"], ((0, 0), (0, dh))),                            # (1, H) f32
        "w3": jnp.pad(p["w3"], ((0, dh), (0, dh))).astype(dot_dtype),         # (H, H)
        "b3": jnp.pad(p["b3"], ((0, 0), (0, dh))),                            # (1, H) f32
        "w4": jnp.pad(p["w4"].T, ((0, 0), (0, dh))).astype(dot_dtype),        # (1, H)
        "b4": p["b4"],                                                        # (1, 1) SMEM
    }


# --------------------------------------------------------------------------
# Wrapper
# --------------------------------------------------------------------------
def _pick_tb(b_pad):
    """Batch tile (multiple of 128 lanes).  >=2 tiles whenever the batch allows
    it so dimension_semantics=('parallel',) shards across v7x's two cores;
    512-lane tiles for large batches to amortize per-step overhead (sweep)."""
    if b_pad <= 128:
        return b_pad
    if b_pad <= 1024:
        return max(128, (b_pad // 2) // 128 * 128)
    return 512


def full4net_forward(x, pp, *, tb=None):
    """x: (B, 2) float32.  pp: params from prepare_params().  Returns (B, 1)."""
    B = x.shape[0]
    H = pp["w2"].shape[0]          # padded hid
    LANE = 128

    b_pad = pl.cdiv(B, LANE) * LANE
    if tb is None:
        tb = _pick_tb(b_pad)
    n_tiles = pl.cdiv(b_pad, tb)
    b_pad = n_tiles * tb
    xp = jnp.pad(x, ((0, b_pad - B), (0, 0)))                 # (b_pad, 2)

    resident = lambda shape: pl.BlockSpec(shape, lambda i: (0, 0))
    smem_spec = pl.BlockSpec(memory_space=pltpu.MemorySpace.SMEM)

    if pp["layout"] == "hid_sublane":
        kernel = _full4net_kernel_hid_sublane
        x_in = xp.T                                            # (2, b_pad): batch on lanes
        x_spec = pl.BlockSpec((2, tb), lambda i: (0, i))
        w1_spec, b_spec = resident((H, 2)), resident((H, 1))
    else:
        kernel = _full4net_kernel_hid_lane
        x_in = xp                                              # (b_pad, 2): batch on sublanes
        x_spec = pl.BlockSpec((tb, 2), lambda i: (i, 0))
        w1_spec, b_spec = resident((2, H)), resident((1, H))

    in_specs = [x_spec,
                w1_spec, b_spec,
                resident((H, H)), b_spec,
                resident((H, H)), b_spec,
                resident((1, H)),
                smem_spec]
    out_specs = pl.BlockSpec((1, tb), lambda i: (0, i))        # lane-dense (1, B)

    args = (x_in, pp["w1"], pp["b1"], pp["w2"], pp["b2"],
            pp["w3"], pp["b3"], pp["w4"], pp["b4"])

    # VMEM budget: default double-buffering of the resident blocks + x/out
    # tiles + ~4 live (tb,H)/(H,tb) f32 intermediates.
    resident_bytes = sum(int(a.size) * a.dtype.itemsize for a in args[1:])
    vmem_est = (2 * resident_bytes
                + 2 * (2 * tb + tb) * 4
                + 4 * tb * H * 4)
    compiler_kwargs = dict(dimension_semantics=("parallel",))
    if vmem_est > (32 << 20):
        # Cap at 64 MiB so the request stays within v7x physical VMEM.
        # TODO(synk): single-buffer resident weights (pl.Buffered(1)) and/or
        # tile hid with a reduction grid axis for very large hid.
        compiler_kwargs["vmem_limit_bytes"] = int(min(vmem_est + (8 << 20), 64 << 20))

    # Corrected cost estimate (advisory): layer1 4H, layers2/3 4H^2, layer4 2H
    # flops per sample; 3H tanh + 1 sigmoid transcendentals per sample.
    flops = int(b_pad) * (4 * H + 4 * H * H + 2 * H)
    transc = int(b_pad) * (3 * H + 1)
    bytes_accessed = int(x_in.size) * 4 + resident_bytes + int(b_pad) * 4

    out = pl.pallas_call(
        kernel,
        out_shape=jax.ShapeDtypeStruct((1, b_pad), jnp.float32),
        grid=(n_tiles,),
        in_specs=in_specs,
        out_specs=out_specs,
        compiler_params=pltpu.CompilerParams(**compiler_kwargs),
        cost_estimate=pl.CostEstimate(flops=flops, transcendentals=transc,
                                      bytes_accessed=bytes_accessed),
    )(*args)

    return out[0, :B].reshape(B, 1)


# --------------------------------------------------------------------------
# Reference (pure JAX, f32, high-precision dots)
# --------------------------------------------------------------------------
def reference_forward(x, p):
    hp = jax.lax.Precision.HIGHEST
    h1 = jnp.tanh(jnp.dot(x, p["w1"], precision=hp) + p["b1"])
    h2 = jnp.tanh(jnp.dot(h1, p["w2"], precision=hp) + p["b2"])
    h3 = jnp.tanh(jnp.dot(h2, p["w3"], precision=hp) + p["b3"])
    return jax.nn.sigmoid(jnp.dot(h3, p["w4"], precision=hp) + p["b4"])


if __name__ == "__main__":
    key = jax.random.PRNGKey(0)
    k_x, k_p, k_x2, k_p2 = jax.random.split(key, 4)

    # ---- Case 1: small hid -> transposed (H, TB) layout, f32 dots ----------
    hid, batch = 32, 8
    x = jax.random.normal(k_x, (batch, 2), jnp.float32)
    params = init_params(k_p, hid)
    ref = reference_forward(x, params)

    out_f32 = jax.block_until_ready(
        full4net_forward(x, prepare_params(params, dot_dtype=jnp.float32)))
    assert out_f32.shape == (batch, 1)
    assert jnp.allclose(out_f32, ref, atol=1e-5, rtol=1e-5), "f32 mismatch (hid=32)"

    # Same case with bf16 dot operands (MXU-native on all generations).
    out_bf16 = jax.block_until_ready(
        full4net_forward(x, prepare_params(params, dot_dtype=jnp.bfloat16)))
    assert jnp.allclose(out_bf16, ref, atol=3e-2), "bf16 mismatch (hid=32)"

    # ---- Case 2: hid >= 128 -> lane-major (TB, H) layout, multi-tile grid --
    hid2, batch2 = 256, 300
    x2 = jax.random.normal(k_x2, (batch2, 2), jnp.float32)
    params2 = init_params(k_p2, hid2)
    ref2 = reference_forward(x2, params2)

    out2 = jax.block_until_ready(
        full4net_forward(x2, prepare_params(params2, dot_dtype=jnp.float32)))
    assert out2.shape == (batch2, 1)
    assert jnp.allclose(out2, ref2, atol=1e-4, rtol=1e-4), "f32 mismatch (hid=256)"

    print("KERNEL_OK")
</pallas_src>

<mosaic_0001>
module attributes {stable_mosaic.version = 11 : i64} {
  func.func @_full4net_kernel_hid_sublane(%arg0: i32, %arg1: memref<2x128xf32, #tpu.memory_space<vmem>>, %arg2: memref<32x2xf32, #tpu.memory_space<vmem>>, %arg3: memref<32x1xf32, #tpu.memory_space<vmem>>, %arg4: memref<32x32xf32, #tpu.memory_space<vmem>>, %arg5: memref<32x1xf32, #tpu.memory_space<vmem>>, %arg6: memref<32x32xf32, #tpu.memory_space<vmem>>, %arg7: memref<32x1xf32, #tpu.memory_space<vmem>>, %arg8: memref<1x32xf32, #tpu.memory_space<vmem>>, %arg9: memref<1x1xf32, #tpu.memory_space<smem>>, %arg10: memref<1x128xf32, #tpu.memory_space<vmem>>) attributes {dimension_semantics = [#tpu.dimension_semantics<parallel>], iteration_bounds = array<i64: 1>, scalar_prefetch = 0 : i64, scratch_operands = 0 : i64, tpu.core_type = #tpu.core_type<tc>, window_params = [{transform_indices = @transform_0, window_bounds = array<i64: 2, 128>}, {pipeline_mode = #tpu.pipeline_mode<synchronous>, transform_indices = @transform_1, window_bounds = array<i64: 32, 2>}, {pipeline_mode = #tpu.pipeline_mode<synchronous>, transform_indices = @transform_2, window_bounds = array<i64: 32, 1>}, {pipeline_mode = #tpu.pipeline_mode<synchronous>, transform_indices = @transform_3, window_bounds = array<i64: 32, 32>}, {pipeline_mode = #tpu.pipeline_mode<synchronous>, transform_indices = @transform_4, window_bounds = array<i64: 32, 1>}, {pipeline_mode = #tpu.pipeline_mode<synchronous>, transform_indices = @transform_5, window_bounds = array<i64: 32, 32>}, {pipeline_mode = #tpu.pipeline_mode<synchronous>, transform_indices = @transform_6, window_bounds = array<i64: 32, 1>}, {pipeline_mode = #tpu.pipeline_mode<synchronous>, transform_indices = @transform_7, window_bounds = array<i64: 1, 32>}, {transform_indices = @transform_8, window_bounds = array<i64: 1, 1>}, {transform_indices = @transform_9, window_bounds = array<i64: 1, 128>}]} {
    %c0 = arith.constant 0 : index
    %c0_0 = arith.constant 0 : index
    %0 = vector.load %arg1[%c0, %c0_0] : memref<2x128xf32, #tpu.memory_space<vmem>>, vector<2x128xf32>
    %c0_1 = arith.constant 0 : index
    %c0_2 = arith.constant 0 : index
    %1 = vector.load %arg2[%c0_1, %c0_2] : memref<32x2xf32, #tpu.memory_space<vmem>>, vector<32x1xf32>
    %2 = vector.extract_strided_slice %0 {offsets = [0, 0], sizes = [1, 128], strides = [1, 1]} : vector<2x128xf32> to vector<1x128xf32>
    %3 = vector.broadcast %1 : vector<32x1xf32> to vector<32x128xf32>
    %4 = vector.broadcast %2 : vector<1x128xf32> to vector<32x128xf32>
    %5 = arith.mulf %3, %4 : vector<32x128xf32>
    %c0_3 = arith.constant 0 : index
    %c1 = arith.constant 1 : index
    %6 = vector.load %arg2[%c0_3, %c1] : memref<32x2xf32, #tpu.memory_space<vmem>>, vector<32x1xf32>
    %7 = vector.extract_strided_slice %0 {offsets = [1, 0], sizes = [1, 128], strides = [1, 1]} : vector<2x128xf32> to vector<1x128xf32>
    %8 = vector.broadcast %6 : vector<32x1xf32> to vector<32x128xf32>
    %9 = vector.broadcast %7 : vector<1x128xf32> to vector<32x128xf32>
    %10 = arith.mulf %8, %9 : vector<32x128xf32>
    %11 = arith.addf %5, %10 : vector<32x128xf32>
    %c0_4 = arith.constant 0 : index
    %c0_5 = arith.constant 0 : index
    %12 = vector.load %arg3[%c0_4, %c0_5] : memref<32x1xf32, #tpu.memory_space<vmem>>, vector<32x1xf32>
    %13 = vector.broadcast %12 : vector<32x1xf32> to vector<32x128xf32>
    %14 = arith.addf %11, %13 : vector<32x128xf32>
    %15 = math.tanh %14 : vector<32x128xf32>
    %c0_6 = arith.constant 0 : index
    %c0_7 = arith.constant 0 : index
    %16 = vector.load %arg4[%c0_6, %c0_7] : memref<32x32xf32, #tpu.memory_space<vmem>>, vector<32x32xf32>
    %cst = arith.constant dense<0.000000e+00> : vector<32x128xf32>
    %17 = tpu.matmul %16, %15, %cst {dimension_numbers = #tpu.dot_dimension_numbers<[1], [0], [0], [1], [0, 0, 1, 1], [], []>} : vector<32x32xf32>, vector<32x128xf32>, vector<32x128xf32> -> vector<32x128xf32>
    %c0_8 = arith.constant 0 : index
    %c0_9 = arith.constant 0 : index
    %18 = vector.load %arg5[%c0_8, %c0_9] : memref<32x1xf32, #tpu.memory_space<vmem>>, vector<32x1xf32>
    %19 = vector.broadcast %18 : vector<32x1xf32> to vector<32x128xf32>
    %20 = arith.addf %17, %19 : vector<32x128xf32>
    %21 = math.tanh %20 : vector<32x128xf32>
    %c0_10 = arith.constant 0 : index
    %c0_11 = arith.constant 0 : index
    %22 = vector.load %arg6[%c0_10, %c0_11] : memref<32x32xf32, #tpu.memory_space<vmem>>, vector<32x32xf32>
    %cst_12 = arith.constant dense<0.000000e+00> : vector<32x128xf32>
    %23 = tpu.matmul %22, %21, %cst_12 {dimension_numbers = #tpu.dot_dimension_numbers<[1], [0], [0], [1], [0, 0, 1, 1], [], []>} : vector<32x32xf32>, vector<32x128xf32>, vector<32x128xf32> -> vector<32x128xf32>
    %c0_13 = arith.constant 0 : index
    %c0_14 = arith.constant 0 : index
    %24 = vector.load %arg7[%c0_13, %c0_14] : memref<32x1xf32, #tpu.memory_space<vmem>>, vector<32x1xf32>
    %25 = vector.broadcast %24 : vector<32x1xf32> to vector<32x128xf32>
    %26 = arith.addf %23, %25 : vector<32x128xf32>
    %27 = math.tanh %26 : vector<32x128xf32>
    %c0_15 = arith.constant 0 : index
    %c0_16 = arith.constant 0 : index
    %28 = vector.load %arg8[%c0_15, %c0_16] : memref<1x32xf32, #tpu.memory_space<vmem>>, vector<1x32xf32>
    %cst_17 = arith.constant dense<0.000000e+00> : vector<1x128xf32>
    %29 = tpu.matmul %28, %27, %cst_17 {dimension_numbers = #tpu.dot_dimension_numbers<[1], [0], [0], [1], [0, 0, 1, 1], [], []>} : vector<1x32xf32>, vector<32x128xf32>, vector<1x128xf32> -> vector<1x128xf32>
    %c0_18 = arith.constant 0 : index
    %c0_19 = arith.constant 0 : index
    %30 = memref.load %arg9[%c0_18, %c0_19] : memref<1x1xf32, #tpu.memory_space<smem>>
    %31 = vector.broadcast %30 : f32 to vector<1x128xf32>
    %32 = arith.addf %29, %31 : vector<1x128xf32>
    %33 = arith.negf %32 : vector<1x128xf32>
    %34 = math.exp %33 : vector<1x128xf32>
    %cst_20 = arith.constant 1.000000e+00 : f32
    %35 = vector.broadcast %cst_20 : f32 to vector<1x128xf32>
    %36 = arith.addf %35, %34 : vector<1x128xf32>
    %37 = arith.divf %35, %36 : vector<1x128xf32>
    %c0_21 = arith.constant 0 : index
    %c0_22 = arith.constant 0 : index
    %38 = vector.load %arg10[%c0_21, %c0_22] : memref<1x128xf32, #tpu.memory_space<vmem>>, vector<1x128xf32>
    tpu.vector_store %arg10[%c0_21, %c0_22], %37 {strides = array<i32>} : memref<1x128xf32, #tpu.memory_space<vmem>>, vector<1x128xf32>,
    return
  }
  func.func @transform_0(%arg0: i32) -> (i32, i32) {
    %c0_i32 = arith.constant 0 : i32
    %c0_i32_0 = arith.constant 0 : i32
    return %c0_i32, %arg0 : i32, i32
  }
  func.func @transform_1(%arg0: i32) -> (i32, i32) {
    %c0_i32 = arith.constant 0 : i32
    %c0_i32_0 = arith.constant 0 : i32
    %c0_i32_1 = arith.constant 0 : i32
    return %c0_i32, %c0_i32_0 : i32, i32
  }
  func.func @transform_2(%arg0: i32) -> (i32, i32) {
    %c0_i32 = arith.constant 0 : i32
    %c0_i32_0 = arith.constant 0 : i32
    %c0_i32_1 = arith.constant 0 : i32
    return %c0_i32, %c0_i32_0 : i32, i32
  }
  func.func @transform_3(%arg0: i32) -> (i32, i32) {
    %c0_i32 = arith.constant 0 : i32
    %c0_i32_0 = arith.constant 0 : i32
    %c0_i32_1 = arith.constant 0 : i32
    return %c0_i32, %c0_i32_0 : i32, i32
  }
  func.func @transform_4(%arg0: i32) -> (i32, i32) {
    %c0_i32 = arith.constant 0 : i32
    %c0_i32_0 = arith.constant 0 : i32
    %c0_i32_1 = arith.constant 0 : i32
    return %c0_i32, %c0_i32_0 : i32, i32
  }
  func.func @transform_5(%arg0: i32) -> (i32, i32) {
    %c0_i32 = arith.constant 0 : i32
    %c0_i32_0 = arith.constant 0 : i32
    %c0_i32_1 = arith.constant 0 : i32
    return %c0_i32, %c0_i32_0 : i32, i32
  }
  func.func @transform_6(%arg0: i32) -> (i32, i32) {
    %c0_i32 = arith.constant 0 : i32
    %c0_i32_0 = arith.constant 0 : i32
    %c0_i32_1 = arith.constant 0 : i32
    return %c0_i32, %c0_i32_0 : i32, i32
  }
  func.func @transform_7(%arg0: i32) -> (i32, i32) {
    %c0_i32 = arith.constant 0 : i32
    %c0_i32_0 = arith.constant 0 : i32
    %c0_i32_1 = arith.constant 0 : i32
    return %c0_i32, %c0_i32_0 : i32, i32
  }
  func.func @transform_8(%arg0: i32) -> (i32, i32) {
    %c0_i32 = arith.constant 0 : i32
    %c0_i32_0 = arith.constant 0 : i32
    %c0_i32_1 = arith.constant 0 : i32
    return %c0_i32, %c0_i32_0 : i32, i32
  }
  func.func @transform_9(%arg0: i32) -> (i32, i32) {
    %c0_i32 = arith.constant 0 : i32
    %c0_i32_0 = arith.constant 0 : i32
    return %c0_i32, %arg0 : i32, i32
  }
}

</mosaic_0001>

<llo_original>
// kernel: tpu_custom_call.1
$region0: #{tpu_custom_call.1}
  #allocation0 [shape = 'u32[]', space=smem, size = 0x4, offset = 0x4, fixed_abs, tag = 'smem constant byte address 0x4 - core index']
  #allocation1 [shape = 'u32[144,128]{1,0:T(1,128)}', space=vmem, size = 0x12000, scoped, tag = 'internal scratch']
  #allocation2 [shape = 'f32[1,1]{1,0:T(1,128)S(6)}', space=smem, size = 0x200, scoped, tag = 'scoped memory for tpu_custom_call.1']
  %s0 = inlined_call_operand.vmem [shape: f32[2,128], index: 0, kind: input, shape index: {}]
  %s1 = inlined_call_operand.vmem [shape: f32[32,2], index: 1, kind: input, shape index: {}]
  %s2 = inlined_call_operand.vmem [shape: f32[32,1], index: 2, kind: input, shape index: {}]
  %s3 = inlined_call_operand.vmem [shape: f32[32,32], index: 3, kind: input, shape index: {}]
  %s4 = inlined_call_operand.vmem [shape: f32[32,1], index: 4, kind: input, shape index: {}]
  %s5 = inlined_call_operand.vmem [shape: f32[32,32], index: 5, kind: input, shape index: {}]
  %s6 = inlined_call_operand.vmem [shape: f32[32,1], index: 6, kind: input, shape index: {}]
  %s7 = inlined_call_operand.vmem [shape: f32[1,32], index: 7, kind: input, shape index: {}]
  %s8 = inlined_call_operand.<no memory space> [shape: f32[1,1], index: 8, kind: input, shape index: {}]
  %s9 = inlined_call_operand.hbm [shape: f32[1,128], index: 9, kind: output, shape index: {}]
  %s10 = sld [smem:[#allocation0]]
  $region46: #{tpu_custom_call.1} parent=0
    _
  %s12 = ssub.s32 1, %s10
  %s13 = scalar_select 0, %s12, %s10
  %14 = sst [smem:[#allocation2]] %s8
  $region1: #{tpu_custom_call.1} parent=0
    #allocation3 [shape = 'u8[512]{0}', space=vmem, size = 0x400, scoped, tag = 'output window, operand 0, single buffered']
    #allocation4 [shape = 's32[1]{0}', space=sflag, size = 0x4, scoped, tag = 'scoped memory for tpu_custom_call.1']
    %15 = vsyncpa [#allocation4], 0
    // Predicated region
    $region2: #{tpu_custom_call.1} parent=1 // pred_check
      _
    $region3: #{tpu_custom_call.1} parent=1 // pred_check_branch
      %17 = sbr.rel (0) target = $region5
    $region4: #{tpu_custom_call.1} parent=1 // pred_region
      _
    $region5: #{tpu_custom_call.1} parent=1 // pred_fallthru
      _
    // Predicated region
    $region6: #{tpu_custom_call.1} parent=1 // pred_check
      _
    $region7: #{tpu_custom_call.1} parent=1 // pred_check_branch
      %19 = sbr.rel (0) target = $region9
    $region8: #{tpu_custom_call.1} parent=1 // pred_region
      _
    $region9: #{tpu_custom_call.1} parent=1 // pred_fallthru
      _
    // Predicated region
    $region10: #{tpu_custom_call.1} parent=1 // pred_check
      _
    $region11: #{tpu_custom_call.1} parent=1 // pred_check_branch
      %21 = sbr.rel (0) target = $region13
    $region12: #{tpu_custom_call.1} parent=1 // pred_region
      _
    $region13: #{tpu_custom_call.1} parent=1 // pred_fallthru
      _
    // Predicated region
    $region14: #{tpu_custom_call.1} parent=1 // pred_check
      _
    $region15: #{tpu_custom_call.1} parent=1 // pred_check_branch
      %23 = sbr.rel (0) target = $region17
    $region16: #{tpu_custom_call.1} parent=1 // pred_region
      _
    $region17: #{tpu_custom_call.1} parent=1 // pred_fallthru
      _
    // Predicated region
    $region18: #{tpu_custom_call.1} parent=1 // pred_check
      _
    $region19: #{tpu_custom_call.1} parent=1 // pred_check_branch
      %25 = sbr.rel (0) target = $region21
    $region20: #{tpu_custom_call.1} parent=1 // pred_region
      _
    $region21: #{tpu_custom_call.1} parent=1 // pred_fallthru
      _
    // Predicated region
    $region22: #{tpu_custom_call.1} parent=1 // pred_check
      _
    $region23: #{tpu_custom_call.1} parent=1 // pred_check_branch
      %27 = sbr.rel (0) target = $region25
    $region24: #{tpu_custom_call.1} parent=1 // pred_region
      _
    $region25: #{tpu_custom_call.1} parent=1 // pred_fallthru
      _
    // Predicated region
    $region26: #{tpu_custom_call.1} parent=1 // pred_check
      _
    $region27: #{tpu_custom_call.1} parent=1 // pred_check_branch
      %29 = sbr.rel (0) target = $region29
    $region28: #{tpu_custom_call.1} parent=1 // pred_region
      _
    $region29: #{tpu_custom_call.1} parent=1 // pred_fallthru
      _
    // Predicated region
    $region30: #{tpu_custom_call.1} parent=1 // pred_check
      _
    $region31: #{tpu_custom_call.1} parent=1 // pred_check_branch
      %31 = sbr.rel (0) target = $region33
    $region32: #{tpu_custom_call.1} parent=1 // pred_region
      _
    $region33: #{tpu_custom_call.1} parent=1 // pred_fallthru
      _
    // Predicated region
    $region34: #{tpu_custom_call.1} parent=1 // pred_check
      _
    $region35: #{tpu_custom_call.1} parent=1 // pred_check_branch
      %33 = sbr.rel (0) target = $region37
    $region36: #{tpu_custom_call.1} parent=1 // pred_region
      _
    $region37: #{tpu_custom_call.1} parent=1 // pred_fallthru
      _
    %v34 = vld [vmem:[%s0] sm:$0x3]
    %v35 = vld [vmem:[%s1] sm:$0xff]
    %v36 = vld [vmem:[%s1 + $0x8] sm:$0xff]
    %v37 = vld [vmem:[%s1 + $0x10] sm:$0xff]
    %v38 = vld [vmem:[%s1 + $0x18] sm:$0xff]
    %40 = vset.pattern.permute.xlu0 0
    %41 = vperm.xlu0 %40, %v35
    %v42 = vpop.permute.xlu0 %41
    %45 = vset.pattern.permute.xlu0 0
    %46 = vperm.xlu0 %45, %v36
    %v47 = vpop.permute.xlu0 %46
    %50 = vset.pattern.permute.xlu0 0
    %51 = vperm.xlu0 %50, %v37
    %v52 = vpop.permute.xlu0 %51
    %55 = vset.pattern.permute.xlu0 0
    %56 = vperm.xlu0 %55, %v38
    %v57 = vpop.permute.xlu0 %56
    %v59 = vlaneseq
    %v60 = vshrl.u32 %v59, 7
    %v61 = vsub.s32 0, %v60
    %v62 = vrot.slane %v34, %v61
    %v63 = vmul.f32 %v42, %v62
    %v64 = vmul.f32 %v47, %v62
    %v65 = vmul.f32 %v52, %v62
    %v66 = vmul.f32 %v57, %v62
    %67 = vset.pattern.permute.xlu0 1
    %68 = vperm.xlu0 %67, %v35
    %v69 = vpop.permute.xlu0 %68
    %71 = vset.pattern.permute.xlu0 1
    %72 = vperm.xlu0 %71, %v36
    %v73 = vpop.permute.xlu0 %72
    %75 = vset.pattern.permute.xlu0 1
    %76 = vperm.xlu0 %75, %v37
    %v77 = vpop.permute.xlu0 %76
    %79 = vset.pattern.permute.xlu0 1
    %80 = vperm.xlu0 %79, %v38
    %v81 = vpop.permute.xlu0 %80
    %v83 = vlaneseq
    %v84 = vshrl.u32 %v83, 7
    %v85 = vsub.s32 1, %v84
    %v86 = vrot.slane %v34, %v85
    %v87 = vmul.f32 %v69, %v86
    %v88 = vmul.f32 %v73, %v86
    %v89 = vmul.f32 %v77, %v86
    %v90 = vmul.f32 %v81, %v86
    %v91 = vadd.f32 %v63, %v87
    %v92 = vadd.f32 %v64, %v88
    %v93 = vadd.f32 %v65, %v89
    %v94 = vadd.f32 %v66, %v90
    %v95 = vld [vmem:[%s2] sm:$0xff]
    %v96 = vld [vmem:[%s2 + $0x8] sm:$0xff]
    %v97 = vld [vmem:[%s2 + $0x10] sm:$0xff]
    %v98 = vld [vmem:[%s2 + $0x18] sm:$0xff]
    %100 = vset.pattern.permute.xlu0 0
    %101 = vperm.xlu0 %100, %v95
    %v102 = vpop.permute.xlu0 %101
    %105 = vset.pattern.permute.xlu0 0
    %106 = vperm.xlu0 %105, %v96
    %v107 = vpop.permute.xlu0 %106
    %110 = vset.pattern.permute.xlu0 0
    %111 = vperm.xlu0 %110, %v97
    %v112 = vpop.permute.xlu0 %111
    %115 = vset.pattern.permute.xlu0 0
    %116 = vperm.xlu0 %115, %v98
    %v117 = vpop.permute.xlu0 %116
    %v119 = vadd.f32 %v91, %v102
    %v120 = vadd.f32 %v92, %v107
    %v121 = vadd.f32 %v93, %v112
    %v122 = vadd.f32 %v94, %v117
    %v123 = vtanh.pop %v119
    %v124 = vtanh.pop %v120
    %v125 = vtanh.pop %v121
    %v126 = vtanh.pop %v122
    %v127 = vld [vmem:[%s3] sm:$0xff]
    %v128 = vld [vmem:[%s3 + $0x8] sm:$0xff]
    %v129 = vld [vmem:[%s3 + $0x10] sm:$0xff]
    %v130 = vld [vmem:[%s3 + $0x18] sm:$0xff]
    %v131 = vld [vmem:[%s4] sm:$0xff]
    %v132 = vld [vmem:[%s4 + $0x8] sm:$0xff]
    %v133 = vld [vmem:[%s4 + $0x10] sm:$0xff]
    %v134 = vld [vmem:[%s4 + $0x18] sm:$0xff]
    %136 = vset.pattern.permute.xlu0 0
    %137 = vperm.xlu0 %136, %v131
    %v138 = vpop.permute.xlu0 %137
    %141 = vset.pattern.permute.xlu0 0
    %142 = vperm.xlu0 %141, %v132
    %v143 = vpop.permute.xlu0 %142
    %146 = vset.pattern.permute.xlu0 0
    %147 = vperm.xlu0 %146, %v133
    %v148 = vpop.permute.xlu0 %147
    %151 = vset.pattern.permute.xlu0 0
    %152 = vperm.xlu0 %151, %v134
    %v153 = vpop.permute.xlu0 %152
    %vm155 = vcmask 261120
    %v157 = vsel %vm155, %v127, 0
    %v160 = vsel %vm155, %v128, 0
    %v163 = vsel %vm155, %v129, 0
    %v166 = vsel %vm155, %v130, 0
    %168 = vmatprep.subr.mxu0 0.0
    %169 = vmatpush1.msra.mxu0 0.0
    %170 = vmatprep.subr.mxu0 0.0
    %171 = vmatpush1.msra.mxu0 0.0
    %172 = vmatprep.subr.mxu0 0.0
    %173 = vmatpush1.msra.mxu0 0.0
    %174 = vmatprep.subr.mxu0 0.0
    %175 = vmatpush1.msra.mxu0 0.0
    %176 = vmatprep.subr.mxu0 0.0
    %177 = vmatpush1.msra.mxu0 0.0
    %178 = vmatprep.subr.mxu0 0.0
    %179 = vmatpush1.msra.mxu0 0.0
    %180 = vmatprep.subr.mxu0 0.0
    %181 = vmatpush1.msra.mxu0 0.0
    %182 = vmatprep.subr.mxu0 0.0
    %183 = vmatpush1.msra.mxu0 0.0
    %184 = vmatprep.subr.mxu0 0.0
    %185 = vmatpush1.msra.mxu0 0.0
    %186 = vmatprep.subr.mxu0 0.0
    %187 = vmatpush1.msra.mxu0 0.0
    %188 = vmatprep.subr.mxu0 0.0
    %189 = vmatpush1.msra.mxu0 0.0
    %190 = vmatprep.subr.mxu0 0.0
    %191 = vmatpush1.msra.mxu0 0.0
    %192 = vmatprep.subr.mxu0 0.0
    %193 = vmatpush1.msra.mxu0 %v126
    %194 = vmatprep.subr.mxu0 0.0
    %195 = vmatpush1.msra.mxu0 %v125
    %196 = vmatprep.subr.mxu0 0.0
    %197 = vmatpush1.msra.mxu0 %v124
    %198 = vmatprep.subr.mxu0 0.0
    %199 = vmatpush1.msra.mxu0 %v123
    %200 = vmatprep.subr.mxu0 0.0
    %201 = vmatpush2.msra.mxu0 0.0
    %202 = vmatprep.subr.mxu0 0.0
    %203 = vmatpush2.msra.mxu0 0.0
    %204 = vmatprep.subr.mxu0 0.0
    %205 = vmatpush2.msra.mxu0 0.0
    %206 = vmatprep.subr.mxu0 0.0
    %207 = vmatpush2.msra.mxu0 0.0
    %208 = vmatprep.subr.mxu0 0.0
    %209 = vmatpush2.msra.mxu0 0.0
    %210 = vmatprep.subr.mxu0 0.0
    %211 = vmatpush2.msra.mxu0 0.0
    %212 = vmatprep.subr.mxu0 0.0
    %213 = vmatpush2.msra.mxu0 0.0
    %214 = vmatprep.subr.mxu0 0.0
    %215 = vmatpush2.msra.mxu0 0.0
    %216 = vmatprep.subr.mxu0 0.0
    %217 = vmatpush2.msra.mxu0 0.0
    %218 = vmatprep.subr.mxu0 0.0
    %219 = vmatpush2.msra.mxu0 0.0
    %220 = vmatprep.subr.mxu0 0.0
    %221 = vmatpush2.msra.mxu0 0.0
    %222 = vmatprep.subr.mxu0 0.0
    %223 = vmatpush2.msra.mxu0 0.0
    %224 = vmatprep.subr.mxu0 0.0
    %225 = vmatpush2.msra.mxu0 0.0
    %226 = vmatprep.subr.mxu0 0.0
    %227 = vmatpush2.msra.mxu0 0.0
    %228 = vmatprep.subr.mxu0 0.0
    %229 = vmatpush2.msra.mxu0 0.0
    %230 = vmatprep.subr.mxu0 0.0
    %231 = vmatpush2.msra.mxu0 0.0
    %232 = vmatprep.mubr.f32.mxu0 0.0
    %233 = vmatmul.mubr.f32.gmra.mxu0 %v157
    %v234 = vpop.f32.mrf.mxu0
    %v235 = vadd.f32 %v138, %v234
    %v236 = vpop.f32.mrf.mxu0
    %237 = vmatprep.mubr.f32.mxu0 0.0
    %238 = vmatmul.mubr.f32.gmra.mxu0 %v160
    %v239 = vpop.f32.mrf.mxu0
    %v240 = vadd.f32 %v143, %v239
    %v241 = vpop.f32.mrf.mxu0
    %242 = vmatprep.mubr.f32.mxu0 0.0
    %243 = vmatmul.mubr.f32.gmra.mxu0 %v163
    %v244 = vpop.f32.mrf.mxu0
    %v245 = vadd.f32 %v148, %v244
    %v246 = vpop.f32.mrf.mxu0
    %247 = vmatprep.mubr.f32.mxu0 0.0
    %248 = vmatmul.mubr.f32.gmra.mxu0 %v166
    %v249 = vpop.f32.mrf.mxu0
    %v250 = vadd.f32 %v153, %v249
    %v251 = vpop.f32.mrf.mxu0
    %252 = vdwg.mxu0
    %v253 = vtanh.pop %v235
    %v254 = vtanh.pop %v240
    %v255 = vtanh.pop %v245
    %v256 = vtanh.pop %v250
    %v257 = vld [vmem:[%s5] sm:$0xff]
    %v258 = vld [vmem:[%s5 + $0x8] sm:$0xff]
    %v259 = vld [vmem:[%s5 + $0x10] sm:$0xff]
    %v260 = vld [vmem:[%s5 + $0x18] sm:$0xff]
    %v261 = vld [vmem:[%s6] sm:$0xff]
    %v262 = vld [vmem:[%s6 + $0x8] sm:$0xff]
    %v263 = vld [vmem:[%s6 + $0x10] sm:$0xff]
    %v264 = vld [vmem:[%s6 + $0x18] sm:$0xff]
    %266 = vset.pattern.permute.xlu0 0
    %267 = vperm.xlu0 %266, %v261
    %v268 = vpop.permute.xlu0 %267
    %271 = vset.pattern.permute.xlu0 0
    %272 = vperm.xlu0 %271, %v262
    %v273 = vpop.permute.xlu0 %272
    %276 = vset.pattern.permute.xlu0 0
    %277 = vperm.xlu0 %276, %v263
    %v278 = vpop.permute.xlu0 %277
    %281 = vset.pattern.permute.xlu0 0
    %282 = vperm.xlu0 %281, %v264
    %v283 = vpop.permute.xlu0 %282
    %v286 = vsel %vm155, %v257, 0
    %v289 = vsel %vm155, %v258, 0
    %v292 = vsel %vm155, %v259, 0
    %v295 = vsel %vm155, %v260, 0
    %297 = vmatprep.subr.mxu0 0.0
    %298 = vmatpush1.msra.mxu0 0.0
    %299 = vmatprep.subr.mxu0 0.0
    %300 = vmatpush1.msra.mxu0 0.0
    %301 = vmatprep.subr.mxu0 0.0
    %302 = vmatpush1.msra.mxu0 0.0
    %303 = vmatprep.subr.mxu0 0.0
    %304 = vmatpush1.msra.mxu0 0.0
    %305 = vmatprep.subr.mxu0 0.0
    %306 = vmatpush1.msra.mxu0 0.0
    %307 = vmatprep.subr.mxu0 0.0
    %308 = vmatpush1.msra.mxu0 0.0
    %309 = vmatprep.subr.mxu0 0.0
    %310 = vmatpush1.msra.mxu0 0.0
    %311 = vmatprep.subr.mxu0 0.0
    %312 = vmatpush1.msra.mxu0 0.0
    %313 = vmatprep.subr.mxu0 0.0
    %314 = vmatpush1.msra.mxu0 0.0
    %315 = vmatprep.subr.mxu0 0.0
    %316 = vmatpush1.msra.mxu0 0.0
    %317 = vmatprep.subr.mxu0 0.0
    %318 = vmatpush1.msra.mxu0 0.0
    %319 = vmatprep.subr.mxu0 0.0
    %320 = vmatpush1.msra.mxu0 0.0
    %321 = vmatprep.subr.mxu0 0.0
    %322 = vmatpush1.msra.mxu0 %v256
    %323 = vmatprep.subr.mxu0 0.0
    %324 = vmatpush1.msra.mxu0 %v255
    %325 = vmatprep.subr.mxu0 0.0
    %326 = vmatpush1.msra.mxu0 %v254
    %327 = vmatprep.subr.mxu0 0.0
    %328 = vmatpush1.msra.mxu0 %v253
    %329 = vmatprep.subr.mxu0 0.0
    %330 = vmatpush2.msra.mxu0 0.0
    %331 = vmatprep.subr.mxu0 0.0
    %332 = vmatpush2.msra.mxu0 0.0
    %333 = vmatprep.subr.mxu0 0.0
    %334 = vmatpush2.msra.mxu0 0.0
    %335 = vmatprep.subr.mxu0 0.0
    %336 = vmatpush2.msra.mxu0 0.0
    %337 = vmatprep.subr.mxu0 0.0
    %338 = vmatpush2.msra.mxu0 0.0
    %339 = vmatprep.subr.mxu0 0.0
    %340 = vmatpush2.msra.mxu0 0.0
    %341 = vmatprep.subr.mxu0 0.0
    %342 = vmatpush2.msra.mxu0 0.0
    %343 = vmatprep.subr.mxu0 0.0
    %344 = vmatpush2.msra.mxu0 0.0
    %345 = vmatprep.subr.mxu0 0.0
    %346 = vmatpush2.msra.mxu0 0.0
    %347 = vmatprep.subr.mxu0 0.0
    %348 = vmatpush2.msra.mxu0 0.0
    %349 = vmatprep.subr.mxu0 0.0
    %350 = vmatpush2.msra.mxu0 0.0
    %351 = vmatprep.subr.mxu0 0.0
    %352 = vmatpush2.msra.mxu0 0.0
    %353 = vmatprep.subr.mxu0 0.0
    %354 = vmatpush2.msra.mxu0 0.0
    %355 = vmatprep.subr.mxu0 0.0
    %356 = vmatpush2.msra.mxu0 0.0
    %357 = vmatprep.subr.mxu0 0.0
    %358 = vmatpush2.msra.mxu0 0.0
    %359 = vmatprep.subr.mxu0 0.0
    %360 = vmatpush2.msra.mxu0 0.0
    %361 = vmatprep.mubr.f32.mxu0 0.0
    %362 = vmatmul.mubr.f32.gmra.mxu0 %v286
    %v363 = vpop.f32.mrf.mxu0
    %v364 = vadd.f32 %v268, %v363
    %v365 = vpop.f32.mrf.mxu0
    %366 = vmatprep.mubr.f32.mxu0 0.0
    %367 = vmatmul.mubr.f32.gmra.mxu0 %v289
    %v368 = vpop.f32.mrf.mxu0
    %v369 = vadd.f32 %v273, %v368
    %v370 = vpop.f32.mrf.mxu0
    %371 = vmatprep.mubr.f32.mxu0 0.0
    %372 = vmatmul.mubr.f32.gmra.mxu0 %v292
    %v373 = vpop.f32.mrf.mxu0
    %v374 = vadd.f32 %v278, %v373
    %v375 = vpop.f32.mrf.mxu0
    %376 = vmatprep.mubr.f32.mxu0 0.0
    %377 = vmatmul.mubr.f32.gmra.mxu0 %v295
    %v378 = vpop.f32.mrf.mxu0
    %v379 = vadd.f32 %v283, %v378
    %v380 = vpop.f32.mrf.mxu0
    %381 = vdwg.mxu0
    %v382 = vtanh.pop %v364
    %v383 = vtanh.pop %v369
    %v384 = vtanh.pop %v374
    %v385 = vtanh.pop %v379
    %v386 = vld [vmem:[%s7] sm:$0x1]
    %s387 = sld [smem:[#allocation2]]
    %v388 = vstv %s387
    %v390 = vsel %vm155, %v386, 0
    %392 = vmatprep.subr.mxu0 0.0
    %393 = vmatpush1.msra.mxu0 0.0
    %394 = vmatprep.subr.mxu0 0.0
    %395 = vmatpush1.msra.mxu0 0.0
    %396 = vmatprep.subr.mxu0 0.0
    %397 = vmatpush1.msra.mxu0 0.0
    %398 = vmatprep.subr.mxu0 0.0
    %399 = vmatpush1.msra.mxu0 0.0
    %400 = vmatprep.subr.mxu0 0.0
    %401 = vmatpush1.msra.mxu0 0.0
    %402 = vmatprep.subr.mxu0 0.0
    %403 = vmatpush1.msra.mxu0 0.0
    %404 = vmatprep.subr.mxu0 0.0
    %405 = vmatpush1.msra.mxu0 0.0
    %406 = vmatprep.subr.mxu0 0.0
    %407 = vmatpush1.msra.mxu0 0.0
    %408 = vmatprep.subr.mxu0 0.0
    %409 = vmatpush1.msra.mxu0 0.0
    %410 = vmatprep.subr.mxu0 0.0
    %411 = vmatpush1.msra.mxu0 0.0
    %412 = vmatprep.subr.mxu0 0.0
    %413 = vmatpush1.msra.mxu0 0.0
    %414 = vmatprep.subr.mxu0 0.0
    %415 = vmatpush1.msra.mxu0 0.0
    %416 = vmatprep.subr.mxu0 0.0
    %417 = vmatpush1.msra.mxu0 %v385
    %418 = vmatprep.subr.mxu0 0.0
    %419 = vmatpush1.msra.mxu0 %v384
    %420 = vmatprep.subr.mxu0 0.0
    %421 = vmatpush1.msra.mxu0 %v383
    %422 = vmatprep.subr.mxu0 0.0
    %423 = vmatpush1.msra.mxu0 %v382
    %424 = vmatprep.subr.mxu0 0.0
    %425 = vmatpush2.msra.mxu0 0.0
    %426 = vmatprep.subr.mxu0 0.0
    %427 = vmatpush2.msra.mxu0 0.0
    %428 = vmatprep.subr.mxu0 0.0
    %429 = vmatpush2.msra.mxu0 0.0
    %430 = vmatprep.subr.mxu0 0.0
    %431 = vmatpush2.msra.mxu0 0.0
    %432 = vmatprep.subr.mxu0 0.0
    %433 = vmatpush2.msra.mxu0 0.0
    %434 = vmatprep.subr.mxu0 0.0
    %435 = vmatpush2.msra.mxu0 0.0
    %436 = vmatprep.subr.mxu0 0.0
    %437 = vmatpush2.msra.mxu0 0.0
    %438 = vmatprep.subr.mxu0 0.0
    %439 = vmatpush2.msra.mxu0 0.0
    %440 = vmatprep.subr.mxu0 0.0
    %441 = vmatpush2.msra.mxu0 0.0
    %442 = vmatprep.subr.mxu0 0.0
    %443 = vmatpush2.msra.mxu0 0.0
    %444 = vmatprep.subr.mxu0 0.0
    %445 = vmatpush2.msra.mxu0 0.0
    %446 = vmatprep.subr.mxu0 0.0
    %447 = vmatpush2.msra.mxu0 0.0
    %448 = vmatprep.subr.mxu0 0.0
    %449 = vmatpush2.msra.mxu0 0.0
    %450 = vmatprep.subr.mxu0 0.0
    %451 = vmatpush2.msra.mxu0 0.0
    %452 = vmatprep.subr.mxu0 0.0
    %453 = vmatpush2.msra.mxu0 0.0
    %454 = vmatprep.subr.mxu0 0.0
    %455 = vmatpush2.msra.mxu0 0.0
    %456 = vmatprep.mubr.f32.mxu0 0.0
    %457 = vmatmul.mubr.f32.gmra.mxu0 %v390
    %v458 = vpop.f32.mrf.mxu0
    %v459 = vadd.f32 %v388, %v458
    %v460 = vpop.f32.mrf.mxu0
    %461 = vdwg.mxu0
    %v462 = vxor.u32 %v459, 2147483648
    %v463 = vmul.f32 %v462, 1.442695
    %v464 = vpow.pop %v463
    %v465 = vadd.f32 %v464, 1.0
    %v466 = vrcp.pop %v465
    %v467 = vmul.f32 1.0, %v466
    %468 = vst [vmem:[#allocation3] sm:$0x1] %v467
    // Predicated region
    $region38: #{tpu_custom_call.1} parent=1 // pred_check
      _
    $region39: #{tpu_custom_call.1} parent=1 // pred_check_branch
      %470 = sbr.rel (0) target = $region41
    $region40: #{tpu_custom_call.1} parent=1 // pred_region
      %s472 = ssub.s32 16, 16
      %473 = vsyncadd [#allocation4], %s472
      %s475 = sshll.u32 [#allocation3], 4
      %s476 = int_to_ptr.vmem [resolvable:$true] %s475
      %478 = dma.vmem_to_hbm [thread:$0]  %s476, 16, %s9, [#allocation4]
    $region41: #{tpu_custom_call.1} parent=1 // pred_fallthru
      _
    // Predicated region
    $region42: #{tpu_custom_call.1} parent=1 // pred_check
      _
    $region43: #{tpu_custom_call.1} parent=1 // pred_check_branch
      %480 = sbr.rel (0) target = $region45
    $region44: #{tpu_custom_call.1} parent=1 // pred_region
      %481 = dma.done [#allocation4], 16
    $region45: #{tpu_custom_call.1} parent=1 // pred_fallthru
      _
    %482 = vsyncpa [#allocation4], 1

</llo_original>
